<compile_context>
chip_gen: v7x
topology: tpu7x:2x2x1
jax: 0.10.0
libtpu: 0.0.40
codegen_flags: <defaults>
</compile_context>

<pallas_src>
import functools

import jax
import jax.numpy as jnp
from jax.experimental import pallas as pl
from jax.experimental.pallas import tpu as pltpu

LANE = 128                       # feature / node axes padded to lane width
VMEM_LIMIT_BYTES = 32 * 1024 * 1024


def _round_up(x, m):
    return ((x + m - 1) // m) * m


def _pick_row_tile(n_rows):
    """Row tile: multiple of 8, big enough to pipeline, and >= 2 grid steps
    whenever possible so the row axis is split across TensorCores (v7x)."""
    for cand in (512, 256, 128, 64, 32, 16, 8):
        if n_rows % cand == 0 and n_rows >= 2 * cand:
            return cand
    return n_rows


# ---------------------------------------------------------------------------
# Kernel 1: fused Linear (+ optional ReLU):  y = x @ W_T + b
#   * W_T is pre-transposed ([in, out]) in the wrapper -> no in-kernel .T
#   * f32 accumulation on the MXU (preferred_element_type), f32 bias add,
#     result stored in the (possibly bf16) output dtype.
# ---------------------------------------------------------------------------
def _linear_kernel(x_ref, w_ref, b_ref, o_ref, *, relu):
    acc = jnp.dot(x_ref[...], w_ref[...], preferred_element_type=jnp.float32)
    acc = acc + b_ref[...]
    if relu:
        acc = jnp.maximum(acc, 0.0)
    o_ref[...] = acc.astype(o_ref.dtype)


def _linear(x, w_t, b, *, relu, out_dtype):
    n_rows, k = x.shape
    m = w_t.shape[1]
    tm = _pick_row_tile(n_rows)
    return pl.pallas_call(
        functools.partial(_linear_kernel, relu=relu),
        out_shape=jax.ShapeDtypeStruct((n_rows, m), out_dtype),
        grid_spec=pltpu.PrefetchScalarGridSpec(
            num_scalar_prefetch=0,
            grid=(n_rows // tm,),
            in_specs=[
                pl.BlockSpec((tm, k), lambda i: (i, 0)),   # x rows (streamed)
                pl.BlockSpec((k, m), lambda i: (0, 0)),    # W_T (loop-invariant)
                pl.BlockSpec((1, m), lambda i: (0, 0)),    # bias (f32)
            ],
            out_specs=pl.BlockSpec((tm, m), lambda i: (i, 0)),  # lane-dense store
        ),
        compiler_params=pltpu.CompilerParams(
            dimension_semantics=("parallel",),
            vmem_limit_bytes=VMEM_LIMIT_BYTES),
    )(x, w_t, b)


# ---------------------------------------------------------------------------
# Kernel 2: SAGE 'pool' aggregation fused with the self/neigh combine.
#   neigh[i] = max_j A[i, j] * p[j]     (p >= 0 after ReLU, A in {0,1}, so this
#                                        equals the masked max; 0 for isolated
#                                        nodes, matching DGL's zero-fill)
#   out      = h @ Ws_T + neigh @ Wn_T + b
# grid = (dst_tiles, src_tiles); the src axis is a running-max reduction held
# in a VMEM accumulator (init at k == 0, combine + store at the last k).
# ---------------------------------------------------------------------------
def _sage_agg_kernel(adj_ref, p_ref, h_ref, ws_ref, wn_ref, b_ref, o_ref,
                     acc_ref, *, src_tile, compute_dtype):
    k = pl.program_id(1)

    @pl.when(k == 0)
    def _():
        acc_ref[...] = jnp.zeros_like(acc_ref)

    adj = adj_ref[...]                        # (tm, src_tile) f32, {0,1}
    p = p_ref[...].astype(jnp.float32)        # (src_tile, H),  >= 0
    acc = acc_ref[...]
    # Static unroll over this tile's sources: 2-D VPU ops only
    # ((tm,1) * (1,H) broadcast-multiply + max) -> lowers cleanly on all gens.
    for s in range(src_tile):
        acc = jnp.maximum(acc, adj[:, s:s + 1] * p[s:s + 1, :])
    acc_ref[...] = acc

    @pl.when(k == pl.num_programs(1) - 1)
    def _():
        out = jnp.dot(h_ref[...], ws_ref[...],
                      preferred_element_type=jnp.float32)
        out = out + jnp.dot(acc.astype(compute_dtype), wn_ref[...],
                            preferred_element_type=jnp.float32)
        out = out + b_ref[...]
        o_ref[...] = out.astype(o_ref.dtype)


def _sage_pool_layer(h, adj, wp_t, bp, ws_t, wn_t, b, *, compute_dtype):
    n_pad, hdim = h.shape
    # pool FC + ReLU (lane-dense (n_pad, hdim) output)
    p = _linear(h, wp_t, bp, relu=True, out_dtype=compute_dtype)

    tm = 32 if n_pad % 32 == 0 else 8     # dst tile (bounded: unrolled max loop)
    ts = LANE                             # src tile (lane axis of the adjacency)
    grid = (n_pad // tm, n_pad // ts)
    return pl.pallas_call(
        functools.partial(_sage_agg_kernel, src_tile=ts,
                          compute_dtype=compute_dtype),
        out_shape=jax.ShapeDtypeStruct((n_pad, hdim), compute_dtype),
        grid_spec=pltpu.PrefetchScalarGridSpec(
            num_scalar_prefetch=0,
            grid=grid,
            in_specs=[
                pl.BlockSpec((tm, ts), lambda i, k: (i, k)),      # A[dst, src]
                pl.BlockSpec((ts, hdim), lambda i, k: (k, 0)),    # pooled feats
                pl.BlockSpec((tm, hdim), lambda i, k: (i, 0)),    # self feats
                pl.BlockSpec((hdim, hdim), lambda i, k: (0, 0)),  # W_self^T
                pl.BlockSpec((hdim, hdim), lambda i, k: (0, 0)),  # W_neigh^T
                pl.BlockSpec((1, hdim), lambda i, k: (0, 0)),     # bias (f32)
            ],
            out_specs=pl.BlockSpec((tm, hdim), lambda i, k: (i, 0)),
            scratch_shapes=[pltpu.VMEM((tm, hdim), jnp.float32)],
        ),
        compiler_params=pltpu.CompilerParams(
            dimension_semantics=("parallel", "arbitrary"),
            vmem_limit_bytes=VMEM_LIMIT_BYTES),
    )(adj, p, h, ws_t, wn_t, b)


def static_sage_forward(node_feats, adj, params, *, compute_dtype=jnp.bfloat16):
    """StaticSAGE.forward on the last snapshot: Linear embed -> 2x SAGEConv('pool').

    node_feats : [N, feats_per_node] f32 dense node features (Nodes_list[-1])
    adj        : [N, N] {0,1}; adj[dst, src] = 1 iff edge src -> dst (graph_list[-1])
    params     : f32 PyTorch-layout weights (W: [out, in]) and biases.
    Activations/weights run in `compute_dtype` (bf16 by default) with f32
    accumulation; the result is returned in f32.
    """
    n, f = node_feats.shape
    n_hid = params["emb_w"].shape[0]

    n_pad = _round_up(n, LANE)     # node axis -> lane-dense adjacency tiles
    f_pad = _round_up(f, LANE)     # feature axes -> lane-dense matmuls/stores
    h_pad = _round_up(n_hid, LANE)

    x = jnp.zeros((n_pad, f_pad), compute_dtype).at[:n, :f].set(
        node_feats.astype(compute_dtype))
    a = jnp.zeros((n_pad, n_pad), jnp.float32).at[:n, :n].set(
        adj.astype(jnp.float32))

    def w_t(w, in_pad, out_pad):   # torch [out, in] -> padded, transposed [in, out]
        o, i = w.shape
        return jnp.zeros((in_pad, out_pad), compute_dtype).at[:i, :o].set(
            w.T.astype(compute_dtype))

    def b_row(bias, out_pad):      # bias stays f32 (added to the f32 accumulator)
        return jnp.zeros((1, out_pad), jnp.float32).at[0, :bias.shape[0]].set(
            bias.astype(jnp.float32))

    # embedding_h (dense-feature nn.Linear path)
    h = _linear(x, w_t(params["emb_w"], f_pad, h_pad),
                b_row(params["emb_b"], h_pad),
                relu=False, out_dtype=compute_dtype)

    for lyr in ("sage1", "sage2"):
        h = _sage_pool_layer(
            h, a,
            w_t(params[f"{lyr}_pool_w"], h_pad, h_pad),
            b_row(params[f"{lyr}_pool_b"], h_pad),
            w_t(params[f"{lyr}_self_w"], h_pad, h_pad),
            w_t(params[f"{lyr}_neigh_w"], h_pad, h_pad),
            b_row(params[f"{lyr}_b"], h_pad),
            compute_dtype=compute_dtype)

    return h[:n, :n_hid].astype(jnp.float32)


def static_sage_reference(node_feats, adj, params):
    """Pure-JAX f32 reference with identical semantics."""
    def lin(x, w, b):
        return x @ w.T + b
    h = lin(node_feats, params["emb_w"], params["emb_b"])
    for lyr in ("sage1", "sage2"):
        p = jax.nn.relu(lin(h, params[f"{lyr}_pool_w"], params[f"{lyr}_pool_b"]))
        neigh = jnp.max(adj[:, :, None] * p[None, :, :], axis=1)  # 0 if isolated
        h = (h @ params[f"{lyr}_self_w"].T
             + neigh @ params[f"{lyr}_neigh_w"].T
             + params[f"{lyr}_b"])
    return h


if __name__ == "__main__":
    # Small shapes consistent with the module: 48 nodes, 32 input feats, hidden 64.
    n_nodes, feats_per_node, n_hid = 48, 32, 64

    key = jax.random.PRNGKey(0)
    kx, ka, k0, k1, k2, k3, k4, k5, k6 = jax.random.split(key, 9)

    node_feats = jax.random.normal(kx, (n_nodes, feats_per_node), jnp.float32)

    # Deterministic small graph: undirected ring + a few random edges, no self-loops.
    idx = jnp.arange(n_nodes)
    diff = jnp.abs(idx[:, None] - idx[None, :])
    ring = (diff == 1) | (diff == n_nodes - 1)
    rnd = jax.random.bernoulli(ka, 0.08, (n_nodes, n_nodes))
    adj = ((ring | rnd | rnd.T) & (diff != 0)).astype(jnp.float32)

    def init_linear(k, out_f, in_f):
        kw, kb = jax.random.split(k)
        bound = 1.0 / (in_f ** 0.5)
        return (jax.random.uniform(kw, (out_f, in_f), jnp.float32, -bound, bound),
                jax.random.uniform(kb, (out_f,), jnp.float32, -bound, bound))

    params = {}
    params["emb_w"], params["emb_b"] = init_linear(k0, n_hid, feats_per_node)
    params["sage1_pool_w"], params["sage1_pool_b"] = init_linear(k1, n_hid, n_hid)
    params["sage1_self_w"], _ = init_linear(k2, n_hid, n_hid)
    params["sage1_neigh_w"], params["sage1_b"] = init_linear(k3, n_hid, n_hid)
    params["sage2_pool_w"], params["sage2_pool_b"] = init_linear(k4, n_hid, n_hid)
    params["sage2_self_w"], _ = init_linear(k5, n_hid, n_hid)
    params["sage2_neigh_w"], params["sage2_b"] = init_linear(k6, n_hid, n_hid)

    ref = static_sage_reference(node_feats, adj, params)

    def rel_err(aa, bb):
        return float(jnp.linalg.norm(aa - bb) / (jnp.linalg.norm(bb) + 1e-12))

    # f32 path: checks the kernel math.
    out_f32 = static_sage_forward(node_feats, adj, params,
                                  compute_dtype=jnp.float32)
    jax.block_until_ready(out_f32)
    assert out_f32.shape == (n_nodes, n_hid)
    err32 = rel_err(out_f32, ref)
    assert err32 < 3e-2, f"f32 relative error too large: {err32}"

    # bf16 inputs/weights with f32 accumulation (the production configuration).
    out_bf16 = static_sage_forward(node_feats, adj, params,
                                   compute_dtype=jnp.bfloat16)
    jax.block_until_ready(out_bf16)
    assert out_bf16.shape == (n_nodes, n_hid)
    err16 = rel_err(out_bf16, ref)
    assert err16 < 8e-2, f"bf16 relative error too large: {err16}"

    print("KERNEL_OK")
</pallas_src>

<mosaic_0001>
module attributes {stable_mosaic.version = 11 : i64} {
  func.func @_linear_kernel(%arg0: i32, %arg1: memref<64x128xf32, #tpu.memory_space<vmem>>, %arg2: memref<128x128xf32, #tpu.memory_space<vmem>>, %arg3: memref<1x128xf32, #tpu.memory_space<vmem>>, %arg4: memref<64x128xf32, #tpu.memory_space<vmem>>) attributes {dimension_semantics = [#tpu.dimension_semantics<parallel>], iteration_bounds = array<i64: 2>, scalar_prefetch = 0 : i64, scratch_operands = 0 : i64, tpu.core_type = #tpu.core_type<tc>, window_params = [{transform_indices = @transform_0, window_bounds = array<i64: 64, 128>}, {pipeline_mode = #tpu.pipeline_mode<synchronous>, transform_indices = @transform_1, window_bounds = array<i64: 128, 128>}, {pipeline_mode = #tpu.pipeline_mode<synchronous>, transform_indices = @transform_2, window_bounds = array<i64: 1, 128>}, {transform_indices = @transform_3, window_bounds = array<i64: 64, 128>}]} {
    %c0 = arith.constant 0 : index
    %c0_0 = arith.constant 0 : index
    %0 = vector.load %arg1[%c0, %c0_0] : memref<64x128xf32, #tpu.memory_space<vmem>>, vector<64x128xf32>
    %c0_1 = arith.constant 0 : index
    %c0_2 = arith.constant 0 : index
    %1 = vector.load %arg2[%c0_1, %c0_2] : memref<128x128xf32, #tpu.memory_space<vmem>>, vector<128x128xf32>
    %cst = arith.constant dense<0.000000e+00> : vector<64x128xf32>
    %2 = tpu.matmul %0, %1, %cst {dimension_numbers = #tpu.dot_dimension_numbers<[1], [0], [0], [1], [0, 0, 1, 1], [], []>} : vector<64x128xf32>, vector<128x128xf32>, vector<64x128xf32> -> vector<64x128xf32>
    %c0_3 = arith.constant 0 : index
    %c0_4 = arith.constant 0 : index
    %3 = vector.load %arg3[%c0_3, %c0_4] : memref<1x128xf32, #tpu.memory_space<vmem>>, vector<1x128xf32>
    %4 = vector.broadcast %3 : vector<1x128xf32> to vector<64x128xf32>
    %5 = arith.addf %2, %4 : vector<64x128xf32>
    %c0_5 = arith.constant 0 : index
    %c0_6 = arith.constant 0 : index
    %6 = vector.load %arg4[%c0_5, %c0_6] : memref<64x128xf32, #tpu.memory_space<vmem>>, vector<64x128xf32>
    tpu.vector_store %arg4[%c0_5, %c0_6], %5 {strides = array<i32>} : memref<64x128xf32, #tpu.memory_space<vmem>>, vector<64x128xf32>,
    return
  }
  func.func @transform_0(%arg0: i32) -> (i32, i32) {
    %c0_i32 = arith.constant 0 : i32
    %c0_i32_0 = arith.constant 0 : i32
    return %arg0, %c0_i32 : i32, i32
  }
  func.func @transform_1(%arg0: i32) -> (i32, i32) {
    %c0_i32 = arith.constant 0 : i32
    %c0_i32_0 = arith.constant 0 : i32
    %c0_i32_1 = arith.constant 0 : i32
    return %c0_i32, %c0_i32_0 : i32, i32
  }
  func.func @transform_2(%arg0: i32) -> (i32, i32) {
    %c0_i32 = arith.constant 0 : i32
    %c0_i32_0 = arith.constant 0 : i32
    %c0_i32_1 = arith.constant 0 : i32
    return %c0_i32, %c0_i32_0 : i32, i32
  }
  func.func @transform_3(%arg0: i32) -> (i32, i32) {
    %c0_i32 = arith.constant 0 : i32
    %c0_i32_0 = arith.constant 0 : i32
    return %arg0, %c0_i32 : i32, i32
  }
}

</mosaic_0001>

<llo_original>
// kernel: tpu_custom_call.1
$region0: #{tpu_custom_call.1}
  #allocation0 [shape = 'u32[]', space=smem, size = 0x4, offset = 0x4, fixed_abs, tag = 'smem constant byte address 0x4 - core index']
  #allocation1 [shape = 'u32[144,128]{1,0:T(1,128)}', space=vmem, size = 0x12000, scoped, tag = 'internal scratch']
  %s0 = inlined_call_operand.hbm [shape: f32[128,128], index: 0, kind: input, shape index: {}]
  %s1 = inlined_call_operand.hbm [shape: f32[128,128], index: 1, kind: input, shape index: {}]
  %s2 = inlined_call_operand.vmem [shape: f32[1,128], index: 2, kind: input, shape index: {}]
  %s3 = inlined_call_operand.hbm [shape: f32[128,128], index: 3, kind: output, shape index: {}]
  %s4 = sld [smem:[#allocation0]]
  $region53: #{tpu_custom_call.1} parent=0
    _
  %s6 = ssub.s32 1, %s4
  %s7 = scalar_select 0, %s6, %s4
  $region1: #{tpu_custom_call.1} parent=0
    #allocation2 [shape = 'u8[65536]{0}', space=vmem, size = 0x10000, scoped, tag = 'input window, operand 0']
    #allocation3 [shape = 's32[2]{0}', space=sflag, size = 0x8, scoped, tag = 'scoped memory for tpu_custom_call.1']
    #allocation4 [shape = 's32[2]{0}', space=sflag, size = 0x8, scoped, tag = 'scoped memory for tpu_custom_call.1']
    #allocation5 [shape = 'u8[65536]{0}', space=vmem, size = 0x10000, scoped, tag = 'input window, operand 1, single buffered']
    #allocation6 [shape = 's32[1]{0}', space=sflag, size = 0x4, scoped, tag = 'scoped memory for tpu_custom_call.1']
    #allocation7 [shape = 'u8[65536]{0}', space=vmem, size = 0x10000, scoped, tag = 'output window, operand 0']
    %8 = vsyncpa [#allocation3], 0
    %s9 = scalar_lea.sflag [#allocation3], 1
    %10 = vsyncpa %s9, 0
    %11 = vsyncpa [#allocation6], 0
    %12 = vsyncpa [#allocation4], 0
    %s13 = scalar_lea.sflag [#allocation4], 1
    %14 = vsyncpa %s13, 0
    loop: start=0, step=1, limit=4
    $region2: #{tpu_custom_call.1} parent=1 // loop_pre_header
      _
    $region3: #{tpu_custom_call.1} parent=1 // loop_header
      %s16 = sphi 0, %s20
      %p17 = scmp.ge.s32.totalorder %s16, 4
      %s26 = sphi 0, %s28
      %s29 = sphi 0, %s26
      %s30 = sphi 0, %s29
      %s46 = sphi 0, %s30
      %s50 = sphi 0, %s50
      %s52 = sphi 0, %s50
      %s53 = sphi 0, %s52
      %s67 = sphi 0, %s53
      %s71 = sphi 0, %s71
      %s73 = sphi 0, %s71
      %s74 = sphi 0, %s73
      %s88 = sphi 0, %s74
      %s94 = sphi 0, %s96
      %s97 = sphi 0, %s94
      %s98 = sphi 0, %s97
      %s114 = sphi 0, %s98
    $region4: #{tpu_custom_call.1} parent=1 // loop_header_branch
      %19 = sbr.rel (%p17) target = $region8
    $region5: #{tpu_custom_call.1} parent=1 // loop_body
      %s21 = ssub.s32 %s16, 1
      %s22 = ssub.s32 %s16, 2
      %s23 = sadd.s32 %s16, 1
      %s24 = ssub.s32 %s16, %s23
      %p25 = scmp.eq.s32.totalorder %s24, 0
      %s27 = sadd.s32 %s26, 1
      %s28 = scalar_select %p25, %s26, %s27
      %p31 = pneg %p25
      %p32 = scmp.eq.s32.totalorder %s16, 1
      %p33 = por %p31, %p32
      %p34 = scmp.ne.s32.totalorder %s26, %s29
      %p35 = scmp.eq.s32.totalorder %s16, 0
      %p36 = por %p34, %p35
      %p37 = scmp.ne.s32.totalorder %s26, %s29
      %p38 = scmp.eq.s32.totalorder %s21, 1
      %p39 = por %p37, %p38
      %p40 = scmp.ne.s32.totalorder %s29, %s30
      %p41 = scmp.eq.s32.totalorder %s21, 0
      %p42 = por %p40, %p41
      %p43 = scmp.ne.s32.totalorder %s29, %s30
      %p44 = scmp.eq.s32.totalorder %s22, 1
      %p45 = por %p43, %p44
      %p47 = scmp.ne.s32.totalorder %s30, %s46
      %p48 = scmp.eq.s32.totalorder %s22, 0
      %p49 = por %p47, %p48
      %s51 = sadd.s32 %s50, 1
      %p54 = scmp.eq.s32.totalorder %s16, 1
      %p55 = scmp.ne.s32.totalorder %s50, %s52
      %p56 = scmp.eq.s32.totalorder %s16, 0
      %p57 = por %p55, %p56
      %p58 = scmp.ne.s32.totalorder %s50, %s52
      %p59 = scmp.eq.s32.totalorder %s21, 1
      %p60 = por %p58, %p59
      %p61 = scmp.ne.s32.totalorder %s52, %s53
      %p62 = scmp.eq.s32.totalorder %s21, 0
      %p63 = por %p61, %p62
      %p64 = scmp.ne.s32.totalorder %s52, %s53
      %p65 = scmp.eq.s32.totalorder %s22, 1
      %p66 = por %p64, %p65
      %p68 = scmp.ne.s32.totalorder %s53, %s67
      %p69 = scmp.eq.s32.totalorder %s22, 0
      %p70 = por %p68, %p69
      %s72 = sadd.s32 %s71, 1
      %p75 = scmp.eq.s32.totalorder %s16, 1
      %p76 = scmp.ne.s32.totalorder %s71, %s73
      %p77 = scmp.eq.s32.totalorder %s16, 0
      %p78 = por %p76, %p77
      %p79 = scmp.ne.s32.totalorder %s71, %s73
      %p80 = scmp.eq.s32.totalorder %s21, 1
      %p81 = por %p79, %p80
      %p82 = scmp.ne.s32.totalorder %s73, %s74
      %p83 = scmp.eq.s32.totalorder %s21, 0
      %p84 = por %p82, %p83
      %p85 = scmp.ne.s32.totalorder %s73, %s74
      %p86 = scmp.eq.s32.totalorder %s22, 1
      %p87 = por %p85, %p86
      %p89 = scmp.ne.s32.totalorder %s74, %s88
      %p90 = scmp.eq.s32.totalorder %s22, 0
      %p91 = por %p89, %p90
      %s92 = ssub.s32 %s16, %s23
      %p93 = scmp.eq.s32.totalorder %s92, 0
      %s95 = sadd.s32 %s94, 1
      %s96 = scalar_select %p93, %s94, %s95
      %p99 = pneg %p93
      %p100 = scmp.eq.s32.totalorder %s16, 1
      %p101 = por %p99, %p100
      %p102 = scmp.ne.s32.totalorder %s94, %s97
      %p103 = scmp.eq.s32.totalorder %s16, 0
      %p104 = por %p102, %p103
      %p105 = scmp.ne.s32.totalorder %s94, %s97
      %p106 = scmp.eq.s32.totalorder %s21, 1
      %p107 = por %p105, %p106
      %p108 = scmp.ne.s32.totalorder %s97, %s98
      %p109 = scmp.eq.s32.totalorder %s21, 0
      %p110 = por %p108, %p109
      %p111 = scmp.ne.s32.totalorder %s97, %s98
      %p112 = scmp.eq.s32.totalorder %s22, 1
      %p113 = por %p111, %p112
      %p115 = scmp.ne.s32.totalorder %s98, %s114
      %p116 = scmp.eq.s32.totalorder %s22, 0
      %p117 = por %p115, %p116
      %p118 = scmp.le.s32.totalorder 1, %s16
      %p119 = scmp.lt.s32.totalorder %s16, 3
      %p120 = pnand %p118, %p119
      %p121 = pneg %p120
      // Predicated region
      $region9: #{tpu_custom_call.1} parent=5 // pred_check
        _
      $region10: #{tpu_custom_call.1} parent=5 // pred_check_branch
        %123 = sbr.rel (%p120) target = $region12
      $region11: #{tpu_custom_call.1} parent=5 // pred_region
        %s124 = ssub.s32 %s16, 1
        // Predicated region
        $region13: #{tpu_custom_call.1} parent=11 // pred_check
          %p125 = pneg %p63
        $region14: #{tpu_custom_call.1} parent=11 // pred_check_branch
          %127 = sbr.rel (%p125) target = $region16
        $region15: #{tpu_custom_call.1} parent=11 // pred_region
          %s129 = ssub.s32 2048, 2048
          %130 = vsyncadd [#allocation6], %s129
          %s131 = sshll.u32 [#allocation5], 4
          %s132 = int_to_ptr.vmem [resolvable:$true] %s131
          %137 = dma.hbm_to_vmem [thread:$0]  %s1, 2048, %s132, [#allocation6], 128, 128, 8
        $region16: #{tpu_custom_call.1} parent=11 // pred_fallthru
          _
        // Predicated region
        $region17: #{tpu_custom_call.1} parent=11 // pred_check
          %p138 = pneg %p84
        $region18: #{tpu_custom_call.1} parent=11 // pred_check_branch
          %140 = sbr.rel (%p138) target = $region20
        $region19: #{tpu_custom_call.1} parent=11 // pred_region
          _
        $region20: #{tpu_custom_call.1} parent=11 // pred_fallthru
          _
      $region12: #{tpu_custom_call.1} parent=5 // pred_fallthru
        _
      %p141 = scmp.lt.s32.totalorder %s16, 2
      // Predicated region
      $region21: #{tpu_custom_call.1} parent=5 // pred_check
        %p142 = pneg %p141
      $region22: #{tpu_custom_call.1} parent=5 // pred_check_branch
        %144 = sbr.rel (%p142) target = $region24
      $region23: #{tpu_custom_call.1} parent=5 // pred_region
        // Predicated region
        $region25: #{tpu_custom_call.1} parent=23 // pred_check
          %p145 = pneg %p36
        $region26: #{tpu_custom_call.1} parent=23 // pred_check_branch
          %147 = sbr.rel (%p145) target = $region28
        $region27: #{tpu_custom_call.1} parent=23 // pred_region
          %s148 = sand.u32 %s26, 1
          %s149 = scalar_lea.sflag [#allocation3], %s148
          %s150 = sand.u32 %s26, 1
          %s151 = smul.addr %s150, 64
          %s152 = scalar_lea.vmem [#allocation2], %s151
          %s153 = smul.u32 8, %s16
          %s155 = ssub.s32 1024, 1024
          %156 = vsyncadd %s149, %s155
          %s157 = smul.addr %s153, 128
          %s158 = scalar_lea.hbm %s0, %s157
          %s159 = sshll.u32 %s152, 4
          %s160 = int_to_ptr.vmem [resolvable:$true] %s159
          %165 = dma.hbm_to_vmem [thread:$0]  %s158, 1024, %s160, %s149, 128, 128, 8
        $region28: #{tpu_custom_call.1} parent=23 // pred_fallthru
          _
      $region24: #{tpu_custom_call.1} parent=5 // pred_fallthru
        _
      %p166 = scmp.le.s32.totalorder 1, %s16
      %p167 = scmp.lt.s32.totalorder %s16, 3
      %p168 = pnand %p166, %p167
      %p169 = pneg %p168
      // Predicated region
      $region29: #{tpu_custom_call.1} parent=5 // pred_check
        _
      $region30: #{tpu_custom_call.1} parent=5 // pred_check_branch
        %171 = sbr.rel (%p168) target = $region32
      $region31: #{tpu_custom_call.1} parent=5 // pred_region
        %s172 = ssub.s32 %s16, 1
        %s173 = sand.u32 %s29, 1
        %s174 = scalar_lea.sflag [#allocation3], %s173
        %s175 = sand.u32 %s29, 1
        %s176 = smul.addr %s175, 64
        %s177 = scalar_lea.vmem [#allocation2], %s176
        // Predicated region
        $region33: #{tpu_custom_call.1} parent=31 // pred_check
          %p178 = pneg %p42
        $region34: #{tpu_custom_call.1} parent=31 // pred_check_branch
          %180 = sbr.rel (%p178) target = $region36
        $region35: #{tpu_custom_call.1} parent=31 // pred_region
          %181 = dma.done %s174, 1024
        $region36: #{tpu_custom_call.1} parent=31 // pred_fallthru
          _
        // Predicated region
        $region37: #{tpu_custom_call.1} parent=31 // pred_check
          %p182 = pneg %p63
        $region38: #{tpu_custom_call.1} parent=31 // pred_check_branch
          %184 = sbr.rel (%p182) target = $region40
        $region39: #{tpu_custom_call.1} parent=31 // pred_region
          %185 = dma.done [#allocation6], 2048
        $region40: #{tpu_custom_call.1} parent=31 // pred_fallthru
          _
        %s186 = sand.u32 %s29, 1
        %s187 = scalar_lea.sflag [#allocation3], %s186
        %s188 = sand.u32 %s29, 1
        %s189 = smul.addr %s188, 64
        %s190 = scalar_lea.vmem [#allocation2], %s189
        %p191 = pneg %p42
        %p192 = pneg %p39
        %p193 = pneg %p63
        %p194 = pneg %p60
        %p195 = pneg %p84
        %p196 = pneg %p81
        %p197 = pneg %p110
        %p198 = pneg %p107
        %s199 = sand.u32 %s97, 1
        %s200 = scalar_lea.sflag [#allocation4], %s199
        %s201 = sand.u32 %s97, 1
        %s202 = smul.addr %s201, 64
        %s203 = scalar_lea.vmem [#allocation7], %s202
        %s204 = smul.u32 8, %s21
        %s205 = smul.u32 8, %s21
        %v206 = vld [vmem:[%s177] sm:$0xff]
        %v207 = vld [vmem:[%s177 + $0x8] sm:$0xff]
        %v208 = vld [vmem:[%s177 + $0x10] sm:$0xff]
        %v209 = vld [vmem:[%s177 + $0x18] sm:$0xff]
        %v210 = vld [vmem:[%s177 + $0x20] sm:$0xff]
        %v211 = vld [vmem:[%s177 + $0x28] sm:$0xff]
        %v212 = vld [vmem:[%s177 + $0x30] sm:$0xff]
        %v213 = vld [vmem:[%s177 + $0x38] sm:$0xff]
        %v214 = vld [vmem:[#allocation5] sm:$0xff]
        %v215 = vld [vmem:[#allocation5 + $0x8] sm:$0xff]
        %v216 = vld [vmem:[#allocation5 + $0x10] sm:$0xff]
        %v217 = vld [vmem:[#allocation5 + $0x18] sm:$0xff]
        %v218 = vld [vmem:[#allocation5 + $0x20] sm:$0xff]
        %v219 = vld [vmem:[#allocation5 + $0x28] sm:$0xff]
        %v220 = vld [vmem:[#allocation5 + $0x30] sm:$0xff]
        %v221 = vld [vmem:[#allocation5 + $0x38] sm:$0xff]
        %v222 = vld [vmem:[#allocation5 + $0x40] sm:$0xff]
        %v223 = vld [vmem:[#allocation5 + $0x48] sm:$0xff]
        %v224 = vld [vmem:[#allocation5 + $0x50] sm:$0xff]
        %v225 = vld [vmem:[#allocation5 + $0x58] sm:$0xff]
        %v226 = vld [vmem:[#allocation5 + $0x60] sm:$0xff]
        %v227 = vld [vmem:[#allocation5 + $0x68] sm:$0xff]
        %v228 = vld [vmem:[#allocation5 + $0x70] sm:$0xff]
        %v229 = vld [vmem:[#allocation5 + $0x78] sm:$0xff]
        %v230 = vld [vmem:[%s2] sm:$0x1]
        %v232 = vlaneseq
        %v233 = vshrl.u32 %v232, 7
        %v234 = vsub.s32 0, %v233
        %v235 = vrot.slane %v230, %v234
        %237 = vmatprep.subr.mxu0 0.0
        %238 = vmatpush1.msra.mxu0 %v214
        %239 = vmatprep.subr.mxu0 0.0
        %240 = vmatpush1.msra.mxu0 %v215
        %241 = vmatprep.subr.mxu0 0.0
        %242 = vmatpush1.msra.mxu0 %v216
        %243 = vmatprep.subr.mxu0 0.0
        %244 = vmatpush1.msra.mxu0 %v217
        %245 = vmatprep.subr.mxu0 0.0
        %246 = vmatpush1.msra.mxu0 %v218
        %247 = vmatprep.subr.mxu0 0.0
        %248 = vmatpush1.msra.mxu0 %v219
        %249 = vmatprep.subr.mxu0 0.0
        %250 = vmatpush1.msra.mxu0 %v220
        %251 = vmatprep.subr.mxu0 0.0
        %252 = vmatpush1.msra.mxu0 %v221
        %253 = vmatprep.subr.mxu0 0.0
        %254 = vmatpush1.msra.mxu0 %v222
        %255 = vmatprep.subr.mxu0 0.0
        %256 = vmatpush1.msra.mxu0 %v223
        %257 = vmatprep.subr.mxu0 0.0
        %258 = vmatpush1.msra.mxu0 %v224
        %259 = vmatprep.subr.mxu0 0.0
        %260 = vmatpush1.msra.mxu0 %v225
        %261 = vmatprep.subr.mxu0 0.0
        %262 = vmatpush1.msra.mxu0 %v226
        %263 = vmatprep.subr.mxu0 0.0
        %264 = vmatpush1.msra.mxu0 %v227
        %265 = vmatprep.subr.mxu0 0.0
        %266 = vmatpush1.msra.mxu0 %v228
        %267 = vmatprep.subr.mxu0 0.0
        %268 = vmatpush1.msra.mxu0 %v229
        %269 = vmatprep.subr.mxu0 0.0
        %270 = vmatpush1.msra.mxu0 0.0
        %271 = vmatprep.subr.mxu0 0.0
        %272 = vmatpush1.msra.mxu0 0.0
        %273 = vmatprep.subr.mxu0 0.0
        %274 = vmatpush1.msra.mxu0 0.0
        %275 = vmatprep.subr.mxu0 0.0
        %276 = vmatpush1.msra.mxu0 0.0
        %277 = vmatprep.subr.mxu0 0.0
        %278 = vmatpush1.msra.mxu0 0.0
        %279 = vmatprep.subr.mxu0 0.0
        %280 = vmatpush1.msra.mxu0 0.0
        %281 = vmatprep.subr.mxu0 0.0
        %282 = vmatpush1.msra.mxu0 0.0
        %283 = vmatprep.subr.mxu0 0.0
        %284 = vmatpush1.msra.mxu0 0.0
        %285 = vmatprep.subr.mxu0 0.0
        %286 = vmatpush1.msra.mxu0 0.0
        %287 = vmatprep.subr.mxu0 0.0
        %288 = vmatpush1.msra.mxu0 0.0
        %289 = vmatprep.subr.mxu0 0.0
        %290 = vmatpush1.msra.mxu0 0.0
        %291 = vmatprep.subr.mxu0 0.0
        %292 = vmatpush1.msra.mxu0 0.0
        %293 = vmatprep.subr.mxu0 0.0
        %294 = vmatpush1.msra.mxu0 0.0
        %295 = vmatprep.subr.mxu0 0.0
        %296 = vmatpush1.msra.mxu0 0.0
        %297 = vmatprep.subr.mxu0 0.0
        %298 = vmatpush1.msra.mxu0 0.0
        %299 = vmatprep.subr.mxu0 0.0
        %300 = vmatpush1.msra.mxu0 0.0
        %301 = vmatprep.mubr.f32.mxu0 0.0
        %302 = vmatmul.mubr.f32.gmra.mrb[0].mxu0 %v206
        %v303 = vpop.f32.mrb[0].mxu0
        %v304 = vadd.f32 %v235, %v303
        %v305 = vpop.f32.mrb[0].mxu0
        %306 = vmatprep.mubr.f32.mxu0 0.0
        %307 = vmatmul.mubr.f32.gmra.mrb[0].mxu0 %v207
        %v308 = vpop.f32.mrb[0].mxu0
        %v309 = vadd.f32 %v235, %v308
        %v310 = vpop.f32.mrb[0].mxu0
        %311 = vmatprep.mubr.f32.mxu0 0.0
        %312 = vmatmul.mubr.f32.gmra.mrb[0].mxu0 %v208
        %v313 = vpop.f32.mrb[0].mxu0
        %v314 = vadd.f32 %v235, %v313
        %v315 = vpop.f32.mrb[0].mxu0
        %316 = vmatprep.mubr.f32.mxu0 0.0
        %317 = vmatmul.mubr.f32.gmra.mrb[0].mxu0 %v209
        %v318 = vpop.f32.mrb[0].mxu0
        %v319 = vadd.f32 %v235, %v318
        %v320 = vpop.f32.mrb[0].mxu0
        %321 = vmatprep.mubr.f32.mxu0 0.0
        %322 = vmatmul.mubr.f32.gmra.mrb[0].mxu0 %v210
        %v323 = vpop.f32.mrb[0].mxu0
        %v324 = vadd.f32 %v235, %v323
        %v325 = vpop.f32.mrb[0].mxu0
        %326 = vmatprep.mubr.f32.mxu0 0.0
        %327 = vmatmul.mubr.f32.gmra.mrb[0].mxu0 %v211
        %v328 = vpop.f32.mrb[0].mxu0
        %v329 = vadd.f32 %v235, %v328
        %v330 = vpop.f32.mrb[0].mxu0
        %331 = vmatprep.mubr.f32.mxu0 0.0
        %332 = vmatmul.mubr.f32.gmra.mrb[0].mxu0 %v212
        %v333 = vpop.f32.mrb[0].mxu0
        %v334 = vadd.f32 %v235, %v333
        %v335 = vpop.f32.mrb[0].mxu0
        %336 = vmatprep.mubr.f32.mxu0 0.0
        %337 = vmatmul.mubr.f32.gmra.mrb[0].mxu0 %v213
        %v338 = vpop.f32.mrb[0].mxu0
        %v339 = vadd.f32 %v235, %v338
        %v340 = vpop.f32.mrb[0].mxu0
        %341 = vdwg.mxu0
        %342 = vst [vmem:[%s203] sm:$0xff] %v304
        %343 = vst [vmem:[%s203 + $0x8] sm:$0xff] %v309
        %344 = vst [vmem:[%s203 + $0x10] sm:$0xff] %v314
        %345 = vst [vmem:[%s203 + $0x18] sm:$0xff] %v319
        %346 = vst [vmem:[%s203 + $0x20] sm:$0xff] %v324
        %347 = vst [vmem:[%s203 + $0x28] sm:$0xff] %v329
        %348 = vst [vmem:[%s203 + $0x30] sm:$0xff] %v334
        %349 = vst [vmem:[%s203 + $0x38] sm:$0xff] %v339
        %s350 = sand.u32 %s97, 1
        %s351 = scalar_lea.sflag [#allocation4], %s350
        %s352 = sand.u32 %s97, 1
        %s353 = smul.addr %s352, 64
        %s354 = scalar_lea.vmem [#allocation7], %s353
        // Predicated region
        $region41: #{tpu_custom_call.1} parent=31 // pred_check
          %p355 = pneg %p107
        $region42: #{tpu_custom_call.1} parent=31 // pred_check_branch
          %357 = sbr.rel (%p355) target = $region44
        $region43: #{tpu_custom_call.1} parent=31 // pred_region
          %s358 = smul.u32 8, %s21
          %s360 = ssub.s32 1024, 1024
          %361 = vsyncadd %s351, %s360
          %s362 = smul.addr %s358, 128
          %s363 = scalar_lea.hbm %s3, %s362
          %s364 = sshll.u32 %s354, 4
          %s365 = int_to_ptr.vmem [resolvable:$true] %s364
          %370 = dma.vmem_to_hbm [thread:$0]  %s365, 1024, %s363, %s351, 128, 128, 8
        $region44: #{tpu_custom_call.1} parent=31 // pred_fallthru
          _
      $region32: #{tpu_custom_call.1} parent=5 // pred_fallthru
        _
      %p371 = scmp.le.s32.totalorder 2, %s16
      // Predicated region
      $region45: #{tpu_custom_call.1} parent=5 // pred_check
        %p372 = pneg %p371
      $region46: #{tpu_custom_call.1} parent=5 // pred_check_branch
        %374 = sbr.rel (%p372) target = $region48
      $region47: #{tpu_custom_call.1} parent=5 // pred_region
        %s375 = ssub.s32 %s16, 2
        // Predicated region
        $region49: #{tpu_custom_call.1} parent=47 // pred_check
          %p376 = pneg %p113
        $region50: #{tpu_custom_call.1} parent=47 // pred_check_branch
          %378 = sbr.rel (%p376) target = $region52
        $region51: #{tpu_custom_call.1} parent=47 // pred_region
          %s379 = sand.u32 %s98, 1
          %s380 = scalar_lea.sflag [#allocation4], %s379
          %s381 = sand.u32 %s98, 1
          %s382 = smul.addr %s381, 64
          %s383 = scalar_lea.vmem [#allocation7], %s382
          %384 = dma.done %s380, 1024
        $region52: #{tpu_custom_call.1} parent=47 // pred_fallthru
          _
      $region48: #{tpu_custom_call.1} parent=5 // pred_fallthru
        _
    $region6: #{tpu_custom_call.1} parent=1 // loop_footer
      %s20 = sadd.s32 1, %s16
    $region7: #{tpu_custom_call.1} parent=1 // loop_footer_branch
      %15 = sbr.rel target = $region3
    $region8: #{tpu_custom_call.1} parent=1 // loop_exit
      _
    %385 = vsyncpa [#allocation3], 1
    %s386 = scalar_lea.sflag [#allocation3], 1
    %387 = vsyncpa %s386, 1
    %388 = vsyncpa [#allocation6], 1
    %389 = vsyncpa [#allocation4], 1
    %s390 = scalar_lea.sflag [#allocation4], 1
    %391 = vsyncpa %s390, 1

</llo_original>
